<compile_context>
chip_gen: v6e
topology: v6e:2x2x1
jax: 0.10.0
libtpu: 0.0.40
codegen_flags: <defaults>
</compile_context>

<pallas_src>
import functools

import jax
import jax.numpy as jnp
from jax.experimental import pallas as pl
from jax.experimental.pallas import tpu as pltpu


def _se_kernel_fused(x_ref, w1t_ref, w2t_ref, o_ref, *, inv_hw):
    """Whole batch resident in VMEM: pool + 2 GEMMs + sigmoid + scale."""
    x = x_ref[...]                                        # (N, R, L) lane-dense packed
    xf = x.astype(jnp.float32)
    # Squeeze: sum the packed spatial rows.  Lane j holds channel j % C; the
    # lane-tiled W1 folds the packed copies back into one per-channel mean.
    pooled = jnp.sum(xf, axis=1) * inv_hw                 # (N, L)
    # Excitation: Linear -> ReLU -> Linear (bias-free), sigmoid on the EUP.
    z = jnp.maximum(
        jnp.dot(pooled, w1t_ref[...], preferred_element_type=jnp.float32), 0.0)
    s = jax.nn.sigmoid(
        jnp.dot(z, w2t_ref[...], preferred_element_type=jnp.float32))  # (N, L), gate tiled per pack
    # Scale: broadcast the per-channel gate over every packed spatial row.
    o_ref[...] = (xf * s[:, None, :]).astype(o_ref.dtype)


def _se_kernel_per_batch(x_ref, w1t_ref, w2t_ref, o_ref, *, inv_hw):
    """One batch element per grid step (fallback for large N / large HW*C)."""
    x = x_ref[0]                                          # (R, L)
    xf = x.astype(jnp.float32)
    pooled = jnp.sum(xf, axis=0, keepdims=True) * inv_hw  # (1, L)
    z = jnp.maximum(
        jnp.dot(pooled, w1t_ref[...], preferred_element_type=jnp.float32), 0.0)
    s = jax.nn.sigmoid(
        jnp.dot(z, w2t_ref[...], preferred_element_type=jnp.float32))  # (1, L)
    o_ref[0] = (xf * s).astype(o_ref.dtype)


def se_layer(x, w1, w2, *, single_block_bytes_limit=8 * 1024 * 1024):
    """SELayer forward.

    x : (N, H, W, C) NHWC (the PyTorch forward permutes to NCHW and back itself).
    w1: (C, C//r)   == fc[0].weight.T   (bias-free)
    w2: (C//r, C)   == fc[2].weight.T   (bias-free)
    """
    N, H, W, C = x.shape
    hid = w1.shape[1]
    hw = H * W

    # ---- lane-dense packing: make the last (lane) dim a multiple of 128 ------
    if C % 128 == 0:
        pack = 1
    elif (128 % C == 0) and (hw % (128 // C) == 0):
        pack = 128 // C
    else:
        pack = 1  # TODO(synk): pad the channel axis to 128 lanes for irregular C.
    L = C * pack                       # lane width of the packed slab
    R = hw // pack                     # packed rows per batch element
    x2 = x.reshape(N, R, L)            # pure layout glue (contiguous reshape)

    # Tile the weights across the packed channel copies so the kernel never
    # slices / rolls lanes:  pooled(L) @ w1t == mean(C) @ w1, and z @ w2t
    # emits the gate already replicated across the pack.
    w1t = jnp.concatenate([w1] * pack, axis=0) if pack > 1 else w1   # (L, hid)
    w2t = jnp.concatenate([w2] * pack, axis=1) if pack > 1 else w2   # (hid, L)
    inv_hw = 1.0 / float(hw)

    itemsize = jnp.dtype(x.dtype).itemsize
    total_bytes = 2 * N * hw * C * itemsize        # x in + out through VMEM

    if total_bytes <= single_block_bytes_limit:
        # Small problem: one invocation, whole batch in VMEM.  Removes grid-step
        # overhead / pipeline prologue and batches the excitation GEMMs (M=N).
        out = pl.pallas_call(
            functools.partial(_se_kernel_fused, inv_hw=inv_hw),
            out_shape=jax.ShapeDtypeStruct((N, R, L), x.dtype),
        )(x2, w1t, w2t)
    else:
        # Large problem: pipeline over the batch; each step streams one (R, L)
        # slab through VMEM.  Batch elements are independent -> megacore on v7x.
        block_bytes = R * L * itemsize
        w_bytes = (w1t.size + w2t.size) * jnp.dtype(w1.dtype).itemsize
        vmem_limit = int(min(100 * 1024 * 1024,
                             4 * block_bytes + w_bytes + (4 << 20)))
        # TODO(synk): add a spatial grid axis (two-pass pool + scale) once one
        # (R, L) slab no longer fits the per-core VMEM budget (v7x: 64 MiB).
        out = pl.pallas_call(
            functools.partial(_se_kernel_per_batch, inv_hw=inv_hw),
            out_shape=jax.ShapeDtypeStruct((N, R, L), x.dtype),
            grid=(N,),
            in_specs=[
                pl.BlockSpec((1, R, L), lambda n: (n, 0, 0)),
                pl.BlockSpec((L, hid), lambda n: (0, 0)),
                pl.BlockSpec((hid, L), lambda n: (0, 0)),
            ],
            out_specs=pl.BlockSpec((1, R, L), lambda n: (n, 0, 0)),
            compiler_params=pltpu.CompilerParams(
                dimension_semantics=("parallel",),
                vmem_limit_bytes=vmem_limit),
        )(x2, w1t, w2t)

    return out.reshape(N, H, W, C)


if __name__ == "__main__":
    CH = 64           # channel
    RED = 16          # reduction (PyTorch default)
    key = jax.random.PRNGKey(0)
    kx, k1, k2 = jax.random.split(key, 3)

    # NHWC input — the PyTorch forward does the NHWC->NCHW->NHWC permutes itself.
    x = jax.random.normal(kx, (2, 16, 16, CH), jnp.float32)
    w1 = jax.random.normal(k1, (CH, CH // RED), jnp.float32) / jnp.sqrt(CH)
    w2 = jax.random.normal(k2, (CH // RED, CH), jnp.float32) / jnp.sqrt(CH // RED)

    # Plain-JAX reference of the PyTorch forward.
    y = jnp.mean(x, axis=(1, 2))                      # (N, C) global avg pool
    y = jnp.maximum(y @ w1, 0.0) @ w2                 # bias-free fc + ReLU
    ref = x * jax.nn.sigmoid(y)[:, None, None, :]     # channel scale

    # 1) Fused single-block path (used at these sizes).
    out = se_layer(x, w1, w2)
    jax.block_until_ready(out)
    assert out.shape == x.shape and out.dtype == x.dtype
    assert bool(jnp.all(jnp.isfinite(out)))
    assert bool(jnp.allclose(out, ref, atol=1e-5, rtol=1e-5))

    # 2) Batch-grid fallback path (forced) — same semantics.
    out_grid = se_layer(x, w1, w2, single_block_bytes_limit=0)
    jax.block_until_ready(out_grid)
    assert bool(jnp.allclose(out_grid, ref, atol=1e-5, rtol=1e-5))

    # 3) bf16 I/O path: halves HBM traffic; pool/GEMMs/sigmoid stay f32.
    xb = x.astype(jnp.bfloat16)
    out_b = se_layer(xb, w1, w2)
    jax.block_until_ready(out_b)
    assert out_b.dtype == jnp.bfloat16
    xbf = xb.astype(jnp.float32)
    yb = jnp.maximum(jnp.mean(xbf, axis=(1, 2)) @ w1, 0.0) @ w2
    ref_b = xbf * jax.nn.sigmoid(yb)[:, None, None, :]
    assert bool(jnp.allclose(out_b.astype(jnp.float32), ref_b, atol=5e-2, rtol=5e-2))

    print("KERNEL_OK")
</pallas_src>

<mosaic_0001>
module attributes {stable_mosaic.version = 11 : i64} {
  func.func @_se_kernel_fused(%arg0: memref<2x128x128xf32, #tpu.memory_space<vmem>>, %arg1: memref<128x4xf32, #tpu.memory_space<vmem>>, %arg2: memref<4x128xf32, #tpu.memory_space<vmem>>, %arg3: memref<2x128x128xf32, #tpu.memory_space<vmem>>) attributes {dimension_semantics = [], scalar_prefetch = 0 : i64, scratch_operands = 0 : i64, tpu.core_type = #tpu.core_type<tc>} {
    %c0 = arith.constant 0 : index
    %c0_0 = arith.constant 0 : index
    %c0_1 = arith.constant 0 : index
    %0 = vector.load %arg0[%c0, %c0_0, %c0_1] : memref<2x128x128xf32, #tpu.memory_space<vmem>>, vector<2x128x128xf32>
    %cst = arith.constant dense<0.000000e+00> : vector<2x128xf32>
    %1 = vector.multi_reduction <add>, %0, %cst [1] : vector<2x128x128xf32> to vector<2x128xf32>
    %cst_2 = arith.constant 3.906250e-03 : f32
    %2 = vector.broadcast %cst_2 : f32 to vector<2x128xf32>
    %3 = arith.mulf %1, %2 : vector<2x128xf32>
    %c0_3 = arith.constant 0 : index
    %c0_4 = arith.constant 0 : index
    %4 = vector.load %arg1[%c0_3, %c0_4] : memref<128x4xf32, #tpu.memory_space<vmem>>, vector<128x4xf32>
    %cst_5 = arith.constant dense<0.000000e+00> : vector<2x4xf32>
    %5 = tpu.matmul %3, %4, %cst_5 {dimension_numbers = #tpu.dot_dimension_numbers<[1], [0], [0], [1], [0, 0, 1, 1], [], []>} : vector<2x128xf32>, vector<128x4xf32>, vector<2x4xf32> -> vector<2x4xf32>
    %cst_6 = arith.constant 0.000000e+00 : f32
    %6 = vector.broadcast %cst_6 : f32 to vector<2x4xf32>
    %7 = arith.maximumf %5, %6 : vector<2x4xf32>
    %c0_7 = arith.constant 0 : index
    %c0_8 = arith.constant 0 : index
    %8 = vector.load %arg2[%c0_7, %c0_8] : memref<4x128xf32, #tpu.memory_space<vmem>>, vector<4x128xf32>
    %cst_9 = arith.constant dense<0.000000e+00> : vector<2x128xf32>
    %9 = tpu.matmul %7, %8, %cst_9 {dimension_numbers = #tpu.dot_dimension_numbers<[1], [0], [0], [1], [0, 0, 1, 1], [], []>} : vector<2x4xf32>, vector<4x128xf32>, vector<2x128xf32> -> vector<2x128xf32>
    %10 = arith.negf %9 : vector<2x128xf32>
    %11 = math.exp %10 : vector<2x128xf32>
    %cst_10 = arith.constant 1.000000e+00 : f32
    %12 = vector.broadcast %cst_10 : f32 to vector<2x128xf32>
    %13 = arith.addf %12, %11 : vector<2x128xf32>
    %14 = arith.divf %12, %13 : vector<2x128xf32>
    %15 = vector.shape_cast %14 : vector<2x128xf32> to vector<2x1x128xf32>
    %16 = vector.broadcast %15 : vector<2x1x128xf32> to vector<2x128x128xf32>
    %17 = arith.mulf %0, %16 : vector<2x128x128xf32>
    %c0_11 = arith.constant 0 : index
    %c0_12 = arith.constant 0 : index
    %c0_13 = arith.constant 0 : index
    %18 = vector.load %arg3[%c0_11, %c0_12, %c0_13] : memref<2x128x128xf32, #tpu.memory_space<vmem>>, vector<2x128x128xf32>
    tpu.vector_store %arg3[%c0_11, %c0_12, %c0_13], %17 {strides = array<i32>} : memref<2x128x128xf32, #tpu.memory_space<vmem>>, vector<2x128x128xf32>,
    return
  }
}

</mosaic_0001>

<llo_original>
// kernel: tpu_custom_call.1
$region0: #{tpu_custom_call.1}
  #allocation0 [shape = 'u32[]', space=smem, size = 0x4, offset = 0x4, fixed_abs, tag = 'smem constant byte address 0x4 - core index']
  #allocation1 [shape = 'u32[144,128]{1,0:T(1,128)}', space=vmem, size = 0x12000, scoped, tag = 'internal scratch']
  %s0 = inlined_call_operand.hbm [shape: f32[2,128,128], index: 0, kind: input, shape index: {}]
  %s1 = inlined_call_operand.vmem [shape: f32[128,4], index: 1, kind: input, shape index: {}]
  %s2 = inlined_call_operand.vmem [shape: f32[4,128], index: 2, kind: input, shape index: {}]
  %s3 = inlined_call_operand.hbm [shape: f32[2,128,128], index: 3, kind: output, shape index: {}]
  %s4 = sld [smem:[#allocation0]]
  $region26: #{tpu_custom_call.1} parent=0
    _
  %s6 = ssub.s32 1, %s4
  %s7 = scalar_select 0, %s6, %s4
  $region1: #{tpu_custom_call.1} parent=0
    #allocation2 [shape = 'u8[131072]{0}', space=vmem, size = 0x20000, scoped, tag = 'input window, operand 0, single buffered']
    #allocation3 [shape = 's32[1]{0}', space=sflag, size = 0x4, scoped, tag = 'scoped memory for tpu_custom_call.1']
    #allocation4 [shape = 's32[1]{0}', space=sflag, size = 0x4, scoped, tag = 'scoped memory for tpu_custom_call.1']
    #allocation5 [shape = 'u8[131072]{0}', space=vmem, size = 0x20000, scoped, tag = 'output window, operand 0, single buffered']
    %8 = vsyncpa [#allocation3], 0
    %9 = vsyncpa [#allocation4], 0
    // Predicated region
    $region2: #{tpu_custom_call.1} parent=1 // pred_check
      _
    $region3: #{tpu_custom_call.1} parent=1 // pred_check_branch
      %11 = sbr.rel (0) target = $region5
    $region4: #{tpu_custom_call.1} parent=1 // pred_region
      %s13 = ssub.s32 4096, 4096
      %14 = vsyncadd [#allocation3], %s13
      %s15 = sshll.u32 [#allocation2], 4
      %s16 = int_to_ptr.vmem [resolvable:$true] %s15
      %21 = dma.hbm_to_vmem [thread:$0]  %s0, 4096, %s16, [#allocation3], 128, 128, 8
    $region5: #{tpu_custom_call.1} parent=1 // pred_fallthru
      _
    // Predicated region
    $region6: #{tpu_custom_call.1} parent=1 // pred_check
      _
    $region7: #{tpu_custom_call.1} parent=1 // pred_check_branch
      %23 = sbr.rel (0) target = $region9
    $region8: #{tpu_custom_call.1} parent=1 // pred_region
      _
    $region9: #{tpu_custom_call.1} parent=1 // pred_fallthru
      _
    // Predicated region
    $region10: #{tpu_custom_call.1} parent=1 // pred_check
      _
    $region11: #{tpu_custom_call.1} parent=1 // pred_check_branch
      %25 = sbr.rel (0) target = $region13
    $region12: #{tpu_custom_call.1} parent=1 // pred_region
      _
    $region13: #{tpu_custom_call.1} parent=1 // pred_fallthru
      _
    // Predicated region
    $region14: #{tpu_custom_call.1} parent=1 // pred_check
      _
    $region15: #{tpu_custom_call.1} parent=1 // pred_check_branch
      %27 = sbr.rel (0) target = $region17
    $region16: #{tpu_custom_call.1} parent=1 // pred_region
      %28 = dma.done [#allocation3], 4096
    $region17: #{tpu_custom_call.1} parent=1 // pred_fallthru
      _
    %v29 = vld [vmem:[#allocation2] sm:$0xff]
    %v30 = vld [vmem:[#allocation2 + $0x8] sm:$0xff]
    %v31 = vld [vmem:[#allocation2 + $0x10] sm:$0xff]
    %v32 = vld [vmem:[#allocation2 + $0x18] sm:$0xff]
    %v33 = vld [vmem:[#allocation2 + $0x20] sm:$0xff]
    %v34 = vld [vmem:[#allocation2 + $0x28] sm:$0xff]
    %v35 = vld [vmem:[#allocation2 + $0x30] sm:$0xff]
    %v36 = vld [vmem:[#allocation2 + $0x38] sm:$0xff]
    %v37 = vld [vmem:[#allocation2 + $0x40] sm:$0xff]
    %v38 = vld [vmem:[#allocation2 + $0x48] sm:$0xff]
    %v39 = vld [vmem:[#allocation2 + $0x50] sm:$0xff]
    %v40 = vld [vmem:[#allocation2 + $0x58] sm:$0xff]
    %v41 = vld [vmem:[#allocation2 + $0x60] sm:$0xff]
    %v42 = vld [vmem:[#allocation2 + $0x68] sm:$0xff]
    %v43 = vld [vmem:[#allocation2 + $0x70] sm:$0xff]
    %v44 = vld [vmem:[#allocation2 + $0x78] sm:$0xff]
    %v45 = vld [vmem:[#allocation2 + $0x80] sm:$0xff]
    %v46 = vld [vmem:[#allocation2 + $0x88] sm:$0xff]
    %v47 = vld [vmem:[#allocation2 + $0x90] sm:$0xff]
    %v48 = vld [vmem:[#allocation2 + $0x98] sm:$0xff]
    %v49 = vld [vmem:[#allocation2 + $0xa0] sm:$0xff]
    %v50 = vld [vmem:[#allocation2 + $0xa8] sm:$0xff]
    %v51 = vld [vmem:[#allocation2 + $0xb0] sm:$0xff]
    %v52 = vld [vmem:[#allocation2 + $0xb8] sm:$0xff]
    %v53 = vld [vmem:[#allocation2 + $0xc0] sm:$0xff]
    %v54 = vld [vmem:[#allocation2 + $0xc8] sm:$0xff]
    %v55 = vld [vmem:[#allocation2 + $0xd0] sm:$0xff]
    %v56 = vld [vmem:[#allocation2 + $0xd8] sm:$0xff]
    %v57 = vld [vmem:[#allocation2 + $0xe0] sm:$0xff]
    %v58 = vld [vmem:[#allocation2 + $0xe8] sm:$0xff]
    %v59 = vld [vmem:[#allocation2 + $0xf0] sm:$0xff]
    %v60 = vld [vmem:[#allocation2 + $0xf8] sm:$0xff]
    %v61 = vadd.f32 %v29, %v30
    %v62 = vadd.f32 %v61, %v31
    %v63 = vadd.f32 %v62, %v32
    %v64 = vadd.f32 %v63, %v33
    %v65 = vadd.f32 %v64, %v34
    %v66 = vadd.f32 %v65, %v35
    %v67 = vadd.f32 %v66, %v36
    %v68 = vadd.f32 %v67, %v37
    %v69 = vadd.f32 %v68, %v38
    %v70 = vadd.f32 %v69, %v39
    %v71 = vadd.f32 %v70, %v40
    %v72 = vadd.f32 %v71, %v41
    %v73 = vadd.f32 %v72, %v42
    %v74 = vadd.f32 %v73, %v43
    %v75 = vadd.f32 %v74, %v44
    %v76 = vrot.slane %v75, 4
    %v77 = vadd.f32 %v75, %v76
    %v78 = vrot.slane %v77, 2
    %v79 = vadd.f32 %v77, %v78
    %v80 = vrot.slane %v79, 1
    %v81 = vadd.f32 %v79, %v80
    %v82 = vadd.f32 %v45, %v46
    %v83 = vadd.f32 %v82, %v47
    %v84 = vadd.f32 %v83, %v48
    %v85 = vadd.f32 %v84, %v49
    %v86 = vadd.f32 %v85, %v50
    %v87 = vadd.f32 %v86, %v51
    %v88 = vadd.f32 %v87, %v52
    %v89 = vadd.f32 %v88, %v53
    %v90 = vadd.f32 %v89, %v54
    %v91 = vadd.f32 %v90, %v55
    %v92 = vadd.f32 %v91, %v56
    %v93 = vadd.f32 %v92, %v57
    %v94 = vadd.f32 %v93, %v58
    %v95 = vadd.f32 %v94, %v59
    %v96 = vadd.f32 %v95, %v60
    %v97 = vrot.slane %v96, 4
    %v98 = vadd.f32 %v96, %v97
    %v99 = vrot.slane %v98, 2
    %v100 = vadd.f32 %v98, %v99
    %v101 = vrot.slane %v100, 1
    %v102 = vadd.f32 %v100, %v101
    %v103 = vmul.f32 %v81, 0.00390625
    %v104 = vmul.f32 %v102, 0.00390625
    %v105 = vld [vmem:[%s1] sm:$0xff]
    %v106 = vld [vmem:[%s1 + $0x8] sm:$0xff]
    %v107 = vld [vmem:[%s1 + $0x10] sm:$0xff]
    %v108 = vld [vmem:[%s1 + $0x18] sm:$0xff]
    %v109 = vld [vmem:[%s1 + $0x20] sm:$0xff]
    %v110 = vld [vmem:[%s1 + $0x28] sm:$0xff]
    %v111 = vld [vmem:[%s1 + $0x30] sm:$0xff]
    %v112 = vld [vmem:[%s1 + $0x38] sm:$0xff]
    %v113 = vld [vmem:[%s1 + $0x40] sm:$0xff]
    %v114 = vld [vmem:[%s1 + $0x48] sm:$0xff]
    %v115 = vld [vmem:[%s1 + $0x50] sm:$0xff]
    %v116 = vld [vmem:[%s1 + $0x58] sm:$0xff]
    %v117 = vld [vmem:[%s1 + $0x60] sm:$0xff]
    %v118 = vld [vmem:[%s1 + $0x68] sm:$0xff]
    %v119 = vld [vmem:[%s1 + $0x70] sm:$0xff]
    %v120 = vld [vmem:[%s1 + $0x78] sm:$0xff]
    %vm123 = vcmask 1041409
    %v124 = vsel %vm123, %v104, %v103
    %126 = vmatprep.subr.mxu0 0.0
    %127 = vmatpush1.msra.mxu0 %v120
    %128 = vmatprep.subr.mxu0 0.0
    %129 = vmatpush1.msra.mxu0 %v119
    %130 = vmatprep.subr.mxu0 0.0
    %131 = vmatpush1.msra.mxu0 %v118
    %132 = vmatprep.subr.mxu0 0.0
    %133 = vmatpush1.msra.mxu0 %v117
    %134 = vmatprep.subr.mxu0 0.0
    %135 = vmatpush1.msra.mxu0 %v116
    %136 = vmatprep.subr.mxu0 0.0
    %137 = vmatpush1.msra.mxu0 %v115
    %138 = vmatprep.subr.mxu0 0.0
    %139 = vmatpush1.msra.mxu0 %v114
    %140 = vmatprep.subr.mxu0 0.0
    %141 = vmatpush1.msra.mxu0 %v113
    %142 = vmatprep.subr.mxu0 0.0
    %143 = vmatpush1.msra.mxu0 %v112
    %144 = vmatprep.subr.mxu0 0.0
    %145 = vmatpush1.msra.mxu0 %v111
    %146 = vmatprep.subr.mxu0 0.0
    %147 = vmatpush1.msra.mxu0 %v110
    %148 = vmatprep.subr.mxu0 0.0
    %149 = vmatpush1.msra.mxu0 %v109
    %150 = vmatprep.subr.mxu0 0.0
    %151 = vmatpush1.msra.mxu0 %v108
    %152 = vmatprep.subr.mxu0 0.0
    %153 = vmatpush1.msra.mxu0 %v107
    %154 = vmatprep.subr.mxu0 0.0
    %155 = vmatpush1.msra.mxu0 %v106
    %156 = vmatprep.subr.mxu0 0.0
    %157 = vmatpush1.msra.mxu0 %v105
    %158 = vmatprep.subr.mxu0 0.0
    %159 = vmatpush2.msra.mxu0 0.0
    %160 = vmatprep.subr.mxu0 0.0
    %161 = vmatpush2.msra.mxu0 0.0
    %162 = vmatprep.subr.mxu0 0.0
    %163 = vmatpush2.msra.mxu0 0.0
    %164 = vmatprep.subr.mxu0 0.0
    %165 = vmatpush2.msra.mxu0 0.0
    %166 = vmatprep.subr.mxu0 0.0
    %167 = vmatpush2.msra.mxu0 0.0
    %168 = vmatprep.subr.mxu0 0.0
    %169 = vmatpush2.msra.mxu0 0.0
    %170 = vmatprep.subr.mxu0 0.0
    %171 = vmatpush2.msra.mxu0 0.0
    %172 = vmatprep.subr.mxu0 0.0
    %173 = vmatpush2.msra.mxu0 0.0
    %174 = vmatprep.subr.mxu0 0.0
    %175 = vmatpush2.msra.mxu0 0.0
    %176 = vmatprep.subr.mxu0 0.0
    %177 = vmatpush2.msra.mxu0 0.0
    %178 = vmatprep.subr.mxu0 0.0
    %179 = vmatpush2.msra.mxu0 0.0
    %180 = vmatprep.subr.mxu0 0.0
    %181 = vmatpush2.msra.mxu0 0.0
    %182 = vmatprep.subr.mxu0 0.0
    %183 = vmatpush2.msra.mxu0 0.0
    %184 = vmatprep.subr.mxu0 0.0
    %185 = vmatpush2.msra.mxu0 0.0
    %186 = vmatprep.subr.mxu0 0.0
    %187 = vmatpush2.msra.mxu0 0.0
    %188 = vmatprep.subr.mxu0 0.0
    %189 = vmatpush2.msra.mxu0 0.0
    %190 = vmatprep.mubr.f32.mxu0 0.0
    %191 = vmatmul.mubr.f32.gmra.mxu0 %v124
    %v192 = vpop.f32.mrf.mxu0
    %v193 = vadd.f32 0.0, %v192
    %v194 = vpop.f32.mrf.mxu0
    %195 = vdwg.mxu0
    %v196 = vmax.f32 %v193, 0.0
    %v197 = vld [vmem:[%s2] sm:$0xf]
    %vm198 = vcmask 31744
    %v200 = vsel %vm198, %v196, 0
    %vm202 = vcmask 1043456
    %v204 = vsel %vm202, %v197, 0
    %206 = vmatprep.subr.mxu0 0.0
    %207 = vmatpush1.msra.mxu0 0.0
    %208 = vmatprep.subr.mxu0 0.0
    %209 = vmatpush1.msra.mxu0 0.0
    %210 = vmatprep.subr.mxu0 0.0
    %211 = vmatpush1.msra.mxu0 0.0
    %212 = vmatprep.subr.mxu0 0.0
    %213 = vmatpush1.msra.mxu0 0.0
    %214 = vmatprep.subr.mxu0 0.0
    %215 = vmatpush1.msra.mxu0 0.0
    %216 = vmatprep.subr.mxu0 0.0
    %217 = vmatpush1.msra.mxu0 0.0
    %218 = vmatprep.subr.mxu0 0.0
    %219 = vmatpush1.msra.mxu0 0.0
    %220 = vmatprep.subr.mxu0 0.0
    %221 = vmatpush1.msra.mxu0 0.0
    %222 = vmatprep.subr.mxu0 0.0
    %223 = vmatpush1.msra.mxu0 0.0
    %224 = vmatprep.subr.mxu0 0.0
    %225 = vmatpush1.msra.mxu0 0.0
    %226 = vmatprep.subr.mxu0 0.0
    %227 = vmatpush1.msra.mxu0 0.0
    %228 = vmatprep.subr.mxu0 0.0
    %229 = vmatpush1.msra.mxu0 0.0
    %230 = vmatprep.subr.mxu0 0.0
    %231 = vmatpush1.msra.mxu0 0.0
    %232 = vmatprep.subr.mxu0 0.0
    %233 = vmatpush1.msra.mxu0 0.0
    %234 = vmatprep.subr.mxu0 0.0
    %235 = vmatpush1.msra.mxu0 0.0
    %236 = vmatprep.subr.mxu0 0.0
    %237 = vmatpush1.msra.mxu0 %v204
    %238 = vmatprep.subr.mxu0 0.0
    %239 = vmatpush2.msra.mxu0 0.0
    %240 = vmatprep.subr.mxu0 0.0
    %241 = vmatpush2.msra.mxu0 0.0
    %242 = vmatprep.subr.mxu0 0.0
    %243 = vmatpush2.msra.mxu0 0.0
    %244 = vmatprep.subr.mxu0 0.0
    %245 = vmatpush2.msra.mxu0 0.0
    %246 = vmatprep.subr.mxu0 0.0
    %247 = vmatpush2.msra.mxu0 0.0
    %248 = vmatprep.subr.mxu0 0.0
    %249 = vmatpush2.msra.mxu0 0.0
    %250 = vmatprep.subr.mxu0 0.0
    %251 = vmatpush2.msra.mxu0 0.0
    %252 = vmatprep.subr.mxu0 0.0
    %253 = vmatpush2.msra.mxu0 0.0
    %254 = vmatprep.subr.mxu0 0.0
    %255 = vmatpush2.msra.mxu0 0.0
    %256 = vmatprep.subr.mxu0 0.0
    %257 = vmatpush2.msra.mxu0 0.0
    %258 = vmatprep.subr.mxu0 0.0
    %259 = vmatpush2.msra.mxu0 0.0
    %260 = vmatprep.subr.mxu0 0.0
    %261 = vmatpush2.msra.mxu0 0.0
    %262 = vmatprep.subr.mxu0 0.0
    %263 = vmatpush2.msra.mxu0 0.0
    %264 = vmatprep.subr.mxu0 0.0
    %265 = vmatpush2.msra.mxu0 0.0
    %266 = vmatprep.subr.mxu0 0.0
    %267 = vmatpush2.msra.mxu0 0.0
    %268 = vmatprep.subr.mxu0 0.0
    %269 = vmatpush2.msra.mxu0 0.0
    %270 = vmatprep.mubr.f32.mxu0 0.0
    %271 = vmatmul.mubr.f32.gmra.mxu0 %v200
    %v272 = vpop.f32.mrf.mxu0
    %v273 = vadd.f32 0.0, %v272
    %v274 = vpop.f32.mrf.mxu0
    %275 = vdwg.mxu0
    %v276 = vxor.u32 %v273, 2147483648
    %v277 = vmul.f32 %v276, 1.442695
    %v278 = vpow.pop %v277
    %v279 = vadd.f32 %v278, 1.0
    %v280 = vrcp.pop %v279
    %v281 = vmul.f32 1.0, %v280
    %v284 = vunpack.c.l.s4 1966171168
    %v285 = vunpack.c.0.s8 %v284
    %v286 = vlaneseq
    %v287 = vshrl.u32 %v286, 7
    %v288 = vsub.s32 %v285, %v287
    %v289 = vrot.slane %v281, %v288
    %v290 = vcombine.high %v289, %v289
    %v292 = vunpack.c.l.s4 1966171168
    %v293 = vunpack.c.0.s8 %v292
    %v294 = vlaneseq
    %v295 = vshrl.u32 %v294, 7
    %v296 = vsub.s32 %v293, %v295
    %v297 = vrot.slane %v289, %v296
    %v299 = vunpack.c.l.s4 1966171168
    %v300 = vunpack.c.0.s8 %v299
    %v301 = vlaneseq
    %v302 = vshrl.u32 %v301, 7
    %v303 = vsub.s32 %v300, %v302
    %v304 = vrot.slane %v290, %v303
    %v305 = vlaneseq
    %v306 = vshrl.u32 %v305, 7
    %v307 = vsub.s32 0, %v306
    %v308 = vrot.slane %v297, %v307
    %v309 = vlaneseq
    %v310 = vshrl.u32 %v309, 7
    %v311 = vsub.s32 0, %v310
    %v312 = vrot.slane %v304, %v311
    %v315 = vmul.f32 %v29, %v308
    %v316 = vmul.f32 %v30, %v308
    %v317 = vmul.f32 %v31, %v308
    %v318 = vmul.f32 %v32, %v308
    %v319 = vmul.f32 %v33, %v308
    %v320 = vmul.f32 %v34, %v308
    %v321 = vmul.f32 %v35, %v308
    %v322 = vmul.f32 %v36, %v308
    %v323 = vmul.f32 %v37, %v308
    %v324 = vmul.f32 %v38, %v308
    %v325 = vmul.f32 %v39, %v308
    %v326 = vmul.f32 %v40, %v308
    %v327 = vmul.f32 %v41, %v308
    %v328 = vmul.f32 %v42, %v308
    %v329 = vmul.f32 %v43, %v308
    %v330 = vmul.f32 %v44, %v308
    %v331 = vmul.f32 %v45, %v312
    %v332 = vmul.f32 %v46, %v312
    %v333 = vmul.f32 %v47, %v312
    %v334 = vmul.f32 %v48, %v312
    %v335 = vmul.f32 %v49, %v312
    %v336 = vmul.f32 %v50, %v312
    %v337 = vmul.f32 %v51, %v312
    %v338 = vmul.f32 %v52, %v312
    %v339 = vmul.f32 %v53, %v312
    %v340 = vmul.f32 %v54, %v312
    %v341 = vmul.f32 %v55, %v312
    %v342 = vmul.f32 %v56, %v312
    %v343 = vmul.f32 %v57, %v312
    %v344 = vmul.f32 %v58, %v312
    %v345 = vmul.f32 %v59, %v312
    %v346 = vmul.f32 %v60, %v312
    %347 = vst [vmem:[#allocation5] sm:$0xff] %v315
    %348 = vst [vmem:[#allocation5 + $0x8] sm:$0xff] %v316
    %349 = vst [vmem:[#allocation5 + $0x10] sm:$0xff] %v317
    %350 = vst [vmem:[#allocation5 + $0x18] sm:$0xff] %v318
    %351 = vst [vmem:[#allocation5 + $0x20] sm:$0xff] %v319
    %352 = vst [vmem:[#allocation5 + $0x28] sm:$0xff] %v320
    %353 = vst [vmem:[#allocation5 + $0x30] sm:$0xff] %v321
    %354 = vst [vmem:[#allocation5 + $0x38] sm:$0xff] %v322
    %355 = vst [vmem:[#allocation5 + $0x40] sm:$0xff] %v323
    %356 = vst [vmem:[#allocation5 + $0x48] sm:$0xff] %v324
    %357 = vst [vmem:[#allocation5 + $0x50] sm:$0xff] %v325
    %358 = vst [vmem:[#allocation5 + $0x58] sm:$0xff] %v326
    %359 = vst [vmem:[#allocation5 + $0x60] sm:$0xff] %v327
    %360 = vst [vmem:[#allocation5 + $0x68] sm:$0xff] %v328
    %361 = vst [vmem:[#allocation5 + $0x70] sm:$0xff] %v329
    %362 = vst [vmem:[#allocation5 + $0x78] sm:$0xff] %v330
    %363 = vst [vmem:[#allocation5 + $0x80] sm:$0xff] %v331
    %364 = vst [vmem:[#allocation5 + $0x88] sm:$0xff] %v332
    %365 = vst [vmem:[#allocation5 + $0x90] sm:$0xff] %v333
    %366 = vst [vmem:[#allocation5 + $0x98] sm:$0xff] %v334
    %367 = vst [vmem:[#allocation5 + $0xa0] sm:$0xff] %v335
    %368 = vst [vmem:[#allocation5 + $0xa8] sm:$0xff] %v336
    %369 = vst [vmem:[#allocation5 + $0xb0] sm:$0xff] %v337
    %370 = vst [vmem:[#allocation5 + $0xb8] sm:$0xff] %v338
    %371 = vst [vmem:[#allocation5 + $0xc0] sm:$0xff] %v339
    %372 = vst [vmem:[#allocation5 + $0xc8] sm:$0xff] %v340
    %373 = vst [vmem:[#allocation5 + $0xd0] sm:$0xff] %v341
    %374 = vst [vmem:[#allocation5 + $0xd8] sm:$0xff] %v342
    %375 = vst [vmem:[#allocation5 + $0xe0] sm:$0xff] %v343
    %376 = vst [vmem:[#allocation5 + $0xe8] sm:$0xff] %v344
    %377 = vst [vmem:[#allocation5 + $0xf0] sm:$0xff] %v345
    %378 = vst [vmem:[#allocation5 + $0xf8] sm:$0xff] %v346
    // Predicated region
    $region18: #{tpu_custom_call.1} parent=1 // pred_check
      _
    $region19: #{tpu_custom_call.1} parent=1 // pred_check_branch
      %380 = sbr.rel (0) target = $region21
    $region20: #{tpu_custom_call.1} parent=1 // pred_region
      %s382 = ssub.s32 4096, 4096
      %383 = vsyncadd [#allocation4], %s382
      %s384 = sshll.u32 [#allocation5], 4
      %s385 = int_to_ptr.vmem [resolvable:$true] %s384
      %390 = dma.vmem_to_hbm [thread:$0]  %s385, 4096, %s3, [#allocation4], 128, 128, 8
    $region21: #{tpu_custom_call.1} parent=1 // pred_fallthru
      _
    // Predicated region
    $region22: #{tpu_custom_call.1} parent=1 // pred_check
      _
    $region23: #{tpu_custom_call.1} parent=1 // pred_check_branch
      %392 = sbr.rel (0) target = $region25
    $region24: #{tpu_custom_call.1} parent=1 // pred_region
      %393 = dma.done [#allocation4], 4096
    $region25: #{tpu_custom_call.1} parent=1 // pred_fallthru
      _
    %394 = vsyncpa [#allocation3], 1
    %395 = vsyncpa [#allocation4], 1

</llo_original>
